<compile_context>
chip_gen: v5e
topology: v5e:2x2
jax: 0.10.0
libtpu: 0.0.40
codegen_flags: <defaults>
</compile_context>

<pallas_src>
import jax
import jax.numpy as jnp
from jax.experimental import pallas as pl
from jax.experimental.pallas import tpu as pltpu


def resnet_block_kernel(x_ref, w1_ref, b1_ref, w2_ref, b2_ref, w3_ref, b3_ref,
                        o_ref):
    """One batch tile: two hidden Linear+ReLU, output Linear, residual add."""
    # Linear(dim -> h1) + ReLU (f32 accumulation on the MXU).
    h = jnp.dot(x_ref[...], w1_ref[...],
                preferred_element_type=jnp.float32) + b1_ref[...]
    h = jnp.maximum(h, 0.0)

    # Linear(h1 -> h2) + ReLU
    h = jnp.dot(h, w2_ref[...], preferred_element_type=jnp.float32) + b2_ref[...]
    h = jnp.maximum(h, 0.0)

    # Linear(h2 -> dim), no final activation, then residual add (in f32).
    y = jnp.dot(h, w3_ref[...], preferred_element_type=jnp.float32) + b3_ref[...]

    # Re-read x_ref here (instead of holding the value loaded at the top)
    # to avoid a long (TB, D) f32 live range across the three matmuls.
    o_ref[...] = (x_ref[...].astype(jnp.float32) + y).astype(o_ref.dtype)


def _round_up(n, m):
    return (n + m - 1) // m * m


def resnet_block(x, params, *, tb_max=8192):
    """x: [B, D]. params: w_i [in, out], b_i [1, out]. Returns x + MLP(x)."""
    B, D = x.shape
    w1, b1, w2, b2, w3, b3 = (params[k] for k in
                              ("w1", "b1", "w2", "b2", "w3", "b3"))
    H1 = w1.shape[1]
    H2 = w2.shape[1]

    # cdiv-balanced batch tiling.  Keep >= 2 grid steps when there is enough
    # work so both v7x TensorCores are fed (harmless on v5e/v6e); TB is a
    # multiple of 8 sublanes; the batch is padded only up to the last tile.
    min_steps = 2 if B >= 16 else 1
    g = max(pl.cdiv(B, tb_max), min_steps)
    TB = _round_up(pl.cdiv(B, g), 8)
    Bp = g * TB

    xp = x if Bp == B else jnp.pad(x, ((0, Bp - B), (0, 0)))

    itemsize = jnp.dtype(x.dtype).itemsize
    flops = 2 * Bp * (D * H1 + H1 * H2 + H2 * D)
    bytes_accessed = itemsize * (
        2 * Bp * D + w1.size + b1.size + w2.size + b2.size + w3.size + b3.size)

    out = pl.pallas_call(
        resnet_block_kernel,
        out_shape=jax.ShapeDtypeStruct((Bp, D), x.dtype),
        grid=(g,),
        in_specs=[
            # x tile, pipelined over the batch; last dim D equals the full
            # array dim so the (8,128) rule is satisfied without padding.
            pl.BlockSpec((TB, D), lambda i: (i, 0)),
            # Weights / biases: grid-invariant blocks -> resident in VMEM.
            pl.BlockSpec((D, H1), lambda i: (0, 0)),
            pl.BlockSpec((1, H1), lambda i: (0, 0)),
            pl.BlockSpec((H1, H2), lambda i: (0, 0)),
            pl.BlockSpec((1, H2), lambda i: (0, 0)),
            pl.BlockSpec((H2, D), lambda i: (0, 0)),
            pl.BlockSpec((1, D), lambda i: (0, 0)),
        ],
        out_specs=pl.BlockSpec((TB, D), lambda i: (i, 0)),
        compiler_params=pltpu.CompilerParams(
            dimension_semantics=("parallel",),
            vmem_limit_bytes=32 * 1024 * 1024,
        ),
        cost_estimate=pl.CostEstimate(
            flops=flops, transcendentals=0, bytes_accessed=bytes_accessed),
    )(xp, w1, b1, w2, b2, w3, b3)

    return out if Bp == B else out[:B]


resnet_block_jit = jax.jit(resnet_block)


def init_params(key, dim, hidden_dims):
    """Deterministic synthetic init (shapes match the MLP's nn.Linear layers)."""
    dims = [dim] + list(hidden_dims) + [dim]
    params = {}
    keys = jax.random.split(key, len(dims) - 1)
    for i, (d_in, d_out) in enumerate(zip(dims[:-1], dims[1:]), start=1):
        kw, kb = jax.random.split(keys[i - 1])
        scale = 1.0 / jnp.sqrt(d_in)
        params[f"w{i}"] = jax.random.uniform(
            kw, (d_in, d_out), jnp.float32, -scale, scale)
        params[f"b{i}"] = jax.random.uniform(
            kb, (1, d_out), jnp.float32, -scale, scale)
    return params


def resnet_block_ref(x, params):
    """Pure-JAX reference of the same forward pass."""
    h = jnp.maximum(x @ params["w1"] + params["b1"], 0.0)
    h = jnp.maximum(h @ params["w2"] + params["b2"], 0.0)
    return x + (h @ params["w3"] + params["b3"])


if __name__ == "__main__":
    key = jax.random.PRNGKey(0)
    k_x, k_x2, k_p = jax.random.split(key, 3)

    DIM = 32
    HIDDEN_DIMS = [64, 64]
    params = init_params(k_p, DIM, HIDDEN_DIMS)

    # Small case matching the module spec (single tile, grid=(1,)).
    B = 8
    x = jax.random.normal(k_x, (B, DIM), jnp.float32)
    y = jax.block_until_ready(resnet_block_jit(x, params))
    y_ref = resnet_block_ref(x, params)
    assert y.shape == (B, DIM)
    assert jnp.allclose(y, y_ref, atol=1e-5, rtol=1e-5)

    # Larger case exercising the balanced batch tiling + batch-pad path
    # (B=1000 -> 2 grid steps of TB=504 rows, 8 padded rows sliced away).
    B2 = 1000
    x2 = jax.random.normal(k_x2, (B2, DIM), jnp.float32)
    y2 = jax.block_until_ready(resnet_block_jit(x2, params))
    y2_ref = resnet_block_ref(x2, params)
    assert y2.shape == (B2, DIM)
    assert jnp.allclose(y2, y2_ref, atol=1e-4, rtol=1e-4)

    print("KERNEL_OK")
</pallas_src>

<mosaic_0001>
module attributes {stable_mosaic.version = 11 : i64} {
  func.func @resnet_block_kernel(%arg0: i32, %arg1: memref<8x32xf32, #tpu.memory_space<vmem>>, %arg2: memref<32x64xf32, #tpu.memory_space<vmem>>, %arg3: memref<1x64xf32, #tpu.memory_space<vmem>>, %arg4: memref<64x64xf32, #tpu.memory_space<vmem>>, %arg5: memref<1x64xf32, #tpu.memory_space<vmem>>, %arg6: memref<64x32xf32, #tpu.memory_space<vmem>>, %arg7: memref<1x32xf32, #tpu.memory_space<vmem>>, %arg8: memref<8x32xf32, #tpu.memory_space<vmem>>) attributes {dimension_semantics = [#tpu.dimension_semantics<parallel>], iteration_bounds = array<i64: 1>, scalar_prefetch = 0 : i64, scratch_operands = 0 : i64, tpu.core_type = #tpu.core_type<tc>, window_params = [{transform_indices = @transform_0, window_bounds = array<i64: 8, 32>}, {pipeline_mode = #tpu.pipeline_mode<synchronous>, transform_indices = @transform_1, window_bounds = array<i64: 32, 64>}, {pipeline_mode = #tpu.pipeline_mode<synchronous>, transform_indices = @transform_2, window_bounds = array<i64: 1, 64>}, {pipeline_mode = #tpu.pipeline_mode<synchronous>, transform_indices = @transform_3, window_bounds = array<i64: 64, 64>}, {pipeline_mode = #tpu.pipeline_mode<synchronous>, transform_indices = @transform_4, window_bounds = array<i64: 1, 64>}, {pipeline_mode = #tpu.pipeline_mode<synchronous>, transform_indices = @transform_5, window_bounds = array<i64: 64, 32>}, {pipeline_mode = #tpu.pipeline_mode<synchronous>, transform_indices = @transform_6, window_bounds = array<i64: 1, 32>}, {transform_indices = @transform_7, window_bounds = array<i64: 8, 32>}]} {
    %c0 = arith.constant 0 : index
    %c0_0 = arith.constant 0 : index
    %0 = vector.load %arg1[%c0, %c0_0] : memref<8x32xf32, #tpu.memory_space<vmem>>, vector<8x32xf32>
    %c0_1 = arith.constant 0 : index
    %c0_2 = arith.constant 0 : index
    %1 = vector.load %arg2[%c0_1, %c0_2] : memref<32x64xf32, #tpu.memory_space<vmem>>, vector<32x64xf32>
    %cst = arith.constant dense<0.000000e+00> : vector<8x64xf32>
    %2 = tpu.matmul %0, %1, %cst {dimension_numbers = #tpu.dot_dimension_numbers<[1], [0], [0], [1], [0, 0, 1, 1], [], []>} : vector<8x32xf32>, vector<32x64xf32>, vector<8x64xf32> -> vector<8x64xf32>
    %c0_3 = arith.constant 0 : index
    %c0_4 = arith.constant 0 : index
    %3 = vector.load %arg3[%c0_3, %c0_4] : memref<1x64xf32, #tpu.memory_space<vmem>>, vector<1x64xf32>
    %4 = vector.broadcast %3 : vector<1x64xf32> to vector<8x64xf32>
    %5 = arith.addf %2, %4 : vector<8x64xf32>
    %cst_5 = arith.constant 0.000000e+00 : f32
    %6 = vector.broadcast %cst_5 : f32 to vector<8x64xf32>
    %7 = arith.maximumf %5, %6 : vector<8x64xf32>
    %c0_6 = arith.constant 0 : index
    %c0_7 = arith.constant 0 : index
    %8 = vector.load %arg4[%c0_6, %c0_7] : memref<64x64xf32, #tpu.memory_space<vmem>>, vector<64x64xf32>
    %cst_8 = arith.constant dense<0.000000e+00> : vector<8x64xf32>
    %9 = tpu.matmul %7, %8, %cst_8 {dimension_numbers = #tpu.dot_dimension_numbers<[1], [0], [0], [1], [0, 0, 1, 1], [], []>} : vector<8x64xf32>, vector<64x64xf32>, vector<8x64xf32> -> vector<8x64xf32>
    %c0_9 = arith.constant 0 : index
    %c0_10 = arith.constant 0 : index
    %10 = vector.load %arg5[%c0_9, %c0_10] : memref<1x64xf32, #tpu.memory_space<vmem>>, vector<1x64xf32>
    %11 = vector.broadcast %10 : vector<1x64xf32> to vector<8x64xf32>
    %12 = arith.addf %9, %11 : vector<8x64xf32>
    %cst_11 = arith.constant 0.000000e+00 : f32
    %13 = vector.broadcast %cst_11 : f32 to vector<8x64xf32>
    %14 = arith.maximumf %12, %13 : vector<8x64xf32>
    %c0_12 = arith.constant 0 : index
    %c0_13 = arith.constant 0 : index
    %15 = vector.load %arg6[%c0_12, %c0_13] : memref<64x32xf32, #tpu.memory_space<vmem>>, vector<64x32xf32>
    %cst_14 = arith.constant dense<0.000000e+00> : vector<8x32xf32>
    %16 = tpu.matmul %14, %15, %cst_14 {dimension_numbers = #tpu.dot_dimension_numbers<[1], [0], [0], [1], [0, 0, 1, 1], [], []>} : vector<8x64xf32>, vector<64x32xf32>, vector<8x32xf32> -> vector<8x32xf32>
    %c0_15 = arith.constant 0 : index
    %c0_16 = arith.constant 0 : index
    %17 = vector.load %arg7[%c0_15, %c0_16] : memref<1x32xf32, #tpu.memory_space<vmem>>, vector<1x32xf32>
    %18 = vector.broadcast %17 : vector<1x32xf32> to vector<8x32xf32>
    %19 = arith.addf %16, %18 : vector<8x32xf32>
    %c0_17 = arith.constant 0 : index
    %c0_18 = arith.constant 0 : index
    %20 = vector.load %arg1[%c0_17, %c0_18] : memref<8x32xf32, #tpu.memory_space<vmem>>, vector<8x32xf32>
    %21 = arith.addf %20, %19 : vector<8x32xf32>
    %c0_19 = arith.constant 0 : index
    %c0_20 = arith.constant 0 : index
    %22 = vector.load %arg8[%c0_19, %c0_20] : memref<8x32xf32, #tpu.memory_space<vmem>>, vector<8x32xf32>
    tpu.vector_store %arg8[%c0_19, %c0_20], %21 {strides = array<i32>} : memref<8x32xf32, #tpu.memory_space<vmem>>, vector<8x32xf32>,
    return
  }
  func.func @transform_0(%arg0: i32) -> (i32, i32) {
    %c0_i32 = arith.constant 0 : i32
    %c0_i32_0 = arith.constant 0 : i32
    return %arg0, %c0_i32 : i32, i32
  }
  func.func @transform_1(%arg0: i32) -> (i32, i32) {
    %c0_i32 = arith.constant 0 : i32
    %c0_i32_0 = arith.constant 0 : i32
    %c0_i32_1 = arith.constant 0 : i32
    return %c0_i32, %c0_i32_0 : i32, i32
  }
  func.func @transform_2(%arg0: i32) -> (i32, i32) {
    %c0_i32 = arith.constant 0 : i32
    %c0_i32_0 = arith.constant 0 : i32
    %c0_i32_1 = arith.constant 0 : i32
    return %c0_i32, %c0_i32_0 : i32, i32
  }
  func.func @transform_3(%arg0: i32) -> (i32, i32) {
    %c0_i32 = arith.constant 0 : i32
    %c0_i32_0 = arith.constant 0 : i32
    %c0_i32_1 = arith.constant 0 : i32
    return %c0_i32, %c0_i32_0 : i32, i32
  }
  func.func @transform_4(%arg0: i32) -> (i32, i32) {
    %c0_i32 = arith.constant 0 : i32
    %c0_i32_0 = arith.constant 0 : i32
    %c0_i32_1 = arith.constant 0 : i32
    return %c0_i32, %c0_i32_0 : i32, i32
  }
  func.func @transform_5(%arg0: i32) -> (i32, i32) {
    %c0_i32 = arith.constant 0 : i32
    %c0_i32_0 = arith.constant 0 : i32
    %c0_i32_1 = arith.constant 0 : i32
    return %c0_i32, %c0_i32_0 : i32, i32
  }
  func.func @transform_6(%arg0: i32) -> (i32, i32) {
    %c0_i32 = arith.constant 0 : i32
    %c0_i32_0 = arith.constant 0 : i32
    %c0_i32_1 = arith.constant 0 : i32
    return %c0_i32, %c0_i32_0 : i32, i32
  }
  func.func @transform_7(%arg0: i32) -> (i32, i32) {
    %c0_i32 = arith.constant 0 : i32
    %c0_i32_0 = arith.constant 0 : i32
    return %arg0, %c0_i32 : i32, i32
  }
}

</mosaic_0001>

<llo_original>
// kernel: resnet_block.1
$region0: #{resnet_block.1}
  #allocation0 [shape = 'u32[]', space=smem, size = 0x4, offset = 0x4, fixed_abs, tag = 'smem constant byte address 0x4 - core index']
  #allocation1 [shape = 'u32[72,128]{1,0:T(1,128)}', space=vmem, size = 0x9000, scoped, tag = 'internal scratch']
  %s0 = inlined_call_operand.hbm [shape: f32[8,32], index: 0, kind: input, shape index: {}]
  %s1 = inlined_call_operand.vmem [shape: f32[32,64], index: 1, kind: input, shape index: {}]
  %s2 = inlined_call_operand.vmem [shape: f32[1,64], index: 2, kind: input, shape index: {}]
  %s3 = inlined_call_operand.vmem [shape: f32[64,64], index: 3, kind: input, shape index: {}]
  %s4 = inlined_call_operand.vmem [shape: f32[1,64], index: 4, kind: input, shape index: {}]
  %s5 = inlined_call_operand.vmem [shape: f32[64,32], index: 5, kind: input, shape index: {}]
  %s6 = inlined_call_operand.vmem [shape: f32[1,32], index: 6, kind: input, shape index: {}]
  %s7 = inlined_call_operand.hbm [shape: f32[8,32], index: 7, kind: output, shape index: {}]
  %s8 = sld [smem:[#allocation0]]
  $region42: #{resnet_block.1} parent=0
    _
  %s10 = ssub.s32 1, %s8
  %s11 = scalar_select 0, %s10, %s8
  $region1: #{resnet_block.1} parent=0
    #allocation2 [shape = 'u8[4096]{0}', space=vmem, size = 0x1000, scoped, tag = 'input window, operand 0, single buffered']
    #allocation3 [shape = 's32[1]{0}', space=sflag, size = 0x4, scoped, tag = 'scoped memory for resnet_block.1']
    #allocation4 [shape = 's32[1]{0}', space=sflag, size = 0x4, scoped, tag = 'scoped memory for resnet_block.1']
    #allocation5 [shape = 'u8[4096]{0}', space=vmem, size = 0x1000, scoped, tag = 'output window, operand 0, single buffered']
    %12 = vsyncpa [#allocation3], 0
    %13 = vsyncpa [#allocation4], 0
    // Predicated region
    $region2: #{resnet_block.1} parent=1 // pred_check
      _
    $region3: #{resnet_block.1} parent=1 // pred_check_branch
      %15 = sbr.rel (0) target = $region5
    $region4: #{resnet_block.1} parent=1 // pred_region
      %17 = vsyncadd [#allocation3], 0
      %s19 = sshll.u32 %s0, 4
      %s20 = int_to_ptr.hbm [resolvable:$true] %s19
      %s21 = sshll.u32 [#allocation2], 4
      %s22 = int_to_ptr.vmem [resolvable:$true] %s21
      %24 = dma.hbm_to_vmem [thread:$0]  %s20, 128, %s22, [#allocation3]
    $region5: #{resnet_block.1} parent=1 // pred_fallthru
      _
    // Predicated region
    $region6: #{resnet_block.1} parent=1 // pred_check
      _
    $region7: #{resnet_block.1} parent=1 // pred_check_branch
      %26 = sbr.rel (0) target = $region9
    $region8: #{resnet_block.1} parent=1 // pred_region
      _
    $region9: #{resnet_block.1} parent=1 // pred_fallthru
      _
    // Predicated region
    $region10: #{resnet_block.1} parent=1 // pred_check
      _
    $region11: #{resnet_block.1} parent=1 // pred_check_branch
      %28 = sbr.rel (0) target = $region13
    $region12: #{resnet_block.1} parent=1 // pred_region
      _
    $region13: #{resnet_block.1} parent=1 // pred_fallthru
      _
    // Predicated region
    $region14: #{resnet_block.1} parent=1 // pred_check
      _
    $region15: #{resnet_block.1} parent=1 // pred_check_branch
      %30 = sbr.rel (0) target = $region17
    $region16: #{resnet_block.1} parent=1 // pred_region
      _
    $region17: #{resnet_block.1} parent=1 // pred_fallthru
      _
    // Predicated region
    $region18: #{resnet_block.1} parent=1 // pred_check
      _
    $region19: #{resnet_block.1} parent=1 // pred_check_branch
      %32 = sbr.rel (0) target = $region21
    $region20: #{resnet_block.1} parent=1 // pred_region
      _
    $region21: #{resnet_block.1} parent=1 // pred_fallthru
      _
    // Predicated region
    $region22: #{resnet_block.1} parent=1 // pred_check
      _
    $region23: #{resnet_block.1} parent=1 // pred_check_branch
      %34 = sbr.rel (0) target = $region25
    $region24: #{resnet_block.1} parent=1 // pred_region
      _
    $region25: #{resnet_block.1} parent=1 // pred_fallthru
      _
    // Predicated region
    $region26: #{resnet_block.1} parent=1 // pred_check
      _
    $region27: #{resnet_block.1} parent=1 // pred_check_branch
      %36 = sbr.rel (0) target = $region29
    $region28: #{resnet_block.1} parent=1 // pred_region
      _
    $region29: #{resnet_block.1} parent=1 // pred_fallthru
      _
    // Predicated region
    $region30: #{resnet_block.1} parent=1 // pred_check
      _
    $region31: #{resnet_block.1} parent=1 // pred_check_branch
      %38 = sbr.rel (0) target = $region33
    $region32: #{resnet_block.1} parent=1 // pred_region
      %40 = dma.done [#allocation3], 128
    $region33: #{resnet_block.1} parent=1 // pred_fallthru
      _
    %v41 = vld [vmem:[#allocation2] sm:$0xff]
    %v42 = vld [vmem:[%s1] sm:$0xff]
    %v43 = vld [vmem:[%s1 + $0x8] sm:$0xff]
    %v44 = vld [vmem:[%s1 + $0x10] sm:$0xff]
    %v45 = vld [vmem:[%s1 + $0x18] sm:$0xff]
    %v46 = vld [vmem:[%s2] sm:$0x1]
    %v48 = vperm.slane %v46, 0
    %vm50 = vcmask 261120
    %v52 = vsel %vm50, %v41, 0
    %54 = vmatpush.msra.mxu0 0.0
    %55 = vmatpush.msra.mxu0 0.0
    %56 = vmatpush.msra.mxu0 0.0
    %57 = vmatpush.msra.mxu0 0.0
    %58 = vmatpush.msra.mxu0 0.0
    %59 = vmatpush.msra.mxu0 0.0
    %60 = vmatpush.msra.mxu0 0.0
    %61 = vmatpush.msra.mxu0 0.0
    %62 = vmatpush.msra.mxu0 0.0
    %63 = vmatpush.msra.mxu0 0.0
    %64 = vmatpush.msra.mxu0 0.0
    %65 = vmatpush.msra.mxu0 0.0
    %66 = vmatpush.msra.mxu0 %v45
    %67 = vmatpush.msra.mxu0 %v44
    %68 = vmatpush.msra.mxu0 %v43
    %69 = vmatpush.msra.mxu0 %v42
    %70 = vmatmul.f32.gmra.mxu0 %v52
    %v71 = vpop.f32.mrf.mxu0
    %v72 = vadd.f32 %v48, %v71
    %73 = vdwg.mxu0
    %v74 = vmax.f32 %v72, 0.0
    %v75 = vld [vmem:[%s3] sm:$0xff]
    %v76 = vld [vmem:[%s3 + $0x8] sm:$0xff]
    %v77 = vld [vmem:[%s3 + $0x10] sm:$0xff]
    %v78 = vld [vmem:[%s3 + $0x18] sm:$0xff]
    %v79 = vld [vmem:[%s3 + $0x20] sm:$0xff]
    %v80 = vld [vmem:[%s3 + $0x28] sm:$0xff]
    %v81 = vld [vmem:[%s3 + $0x30] sm:$0xff]
    %v82 = vld [vmem:[%s3 + $0x38] sm:$0xff]
    %v83 = vld [vmem:[%s4] sm:$0x1]
    %v85 = vperm.slane %v83, 0
    %vm87 = vcmask 523264
    %v89 = vsel %vm87, %v74, 0
    %91 = vmatpush.msra.mxu0 0.0
    %92 = vmatpush.msra.mxu0 0.0
    %93 = vmatpush.msra.mxu0 0.0
    %94 = vmatpush.msra.mxu0 0.0
    %95 = vmatpush.msra.mxu0 0.0
    %96 = vmatpush.msra.mxu0 0.0
    %97 = vmatpush.msra.mxu0 0.0
    %98 = vmatpush.msra.mxu0 0.0
    %99 = vmatpush.msra.mxu0 %v82
    %100 = vmatpush.msra.mxu0 %v81
    %101 = vmatpush.msra.mxu0 %v80
    %102 = vmatpush.msra.mxu0 %v79
    %103 = vmatpush.msra.mxu0 %v78
    %104 = vmatpush.msra.mxu0 %v77
    %105 = vmatpush.msra.mxu0 %v76
    %106 = vmatpush.msra.mxu0 %v75
    %107 = vmatmul.f32.gmra.mxu0 %v89
    %v108 = vpop.f32.mrf.mxu0
    %v109 = vadd.f32 %v85, %v108
    %110 = vdwg.mxu0
    %v111 = vmax.f32 %v109, 0.0
    %v112 = vld [vmem:[%s5] sm:$0xff]
    %v113 = vld [vmem:[%s5 + $0x8] sm:$0xff]
    %v114 = vld [vmem:[%s5 + $0x10] sm:$0xff]
    %v115 = vld [vmem:[%s5 + $0x18] sm:$0xff]
    %v116 = vld [vmem:[%s5 + $0x20] sm:$0xff]
    %v117 = vld [vmem:[%s5 + $0x28] sm:$0xff]
    %v118 = vld [vmem:[%s5 + $0x30] sm:$0xff]
    %v119 = vld [vmem:[%s5 + $0x38] sm:$0xff]
    %v120 = vld [vmem:[%s6] sm:$0x1]
    %v122 = vperm.slane %v120, 0
    %v125 = vsel %vm87, %v111, 0
    %127 = vmatpush.msra.mxu0 0.0
    %128 = vmatpush.msra.mxu0 0.0
    %129 = vmatpush.msra.mxu0 0.0
    %130 = vmatpush.msra.mxu0 0.0
    %131 = vmatpush.msra.mxu0 0.0
    %132 = vmatpush.msra.mxu0 0.0
    %133 = vmatpush.msra.mxu0 0.0
    %134 = vmatpush.msra.mxu0 0.0
    %135 = vmatpush.msra.mxu0 %v119
    %136 = vmatpush.msra.mxu0 %v118
    %137 = vmatpush.msra.mxu0 %v117
    %138 = vmatpush.msra.mxu0 %v116
    %139 = vmatpush.msra.mxu0 %v115
    %140 = vmatpush.msra.mxu0 %v114
    %141 = vmatpush.msra.mxu0 %v113
    %142 = vmatpush.msra.mxu0 %v112
    %143 = vmatmul.f32.gmra.mxu0 %v125
    %v144 = vpop.f32.mrf.mxu0
    %v145 = vadd.f32 %v122, %v144
    %146 = vdwg.mxu0
    %v147 = vadd.f32 %v41, %v145
    %148 = vst.msk [vmem:[#allocation5] sm:$0xff] %vm50, %v147
    // Predicated region
    $region34: #{resnet_block.1} parent=1 // pred_check
      _
    $region35: #{resnet_block.1} parent=1 // pred_check_branch
      %150 = sbr.rel (0) target = $region37
    $region36: #{resnet_block.1} parent=1 // pred_region
      %152 = vsyncadd [#allocation4], 0
      %s154 = sshll.u32 [#allocation5], 4
      %s155 = int_to_ptr.vmem [resolvable:$true] %s154
      %s156 = sshll.u32 %s7, 4
      %s157 = int_to_ptr.hbm [resolvable:$true] %s156
      %159 = dma.vmem_to_hbm [thread:$0]  %s155, 128, %s157, [#allocation4]
    $region37: #{resnet_block.1} parent=1 // pred_fallthru
      _
    // Predicated region
    $region38: #{resnet_block.1} parent=1 // pred_check
      _
    $region39: #{resnet_block.1} parent=1 // pred_check_branch
      %161 = sbr.rel (0) target = $region41
    $region40: #{resnet_block.1} parent=1 // pred_region
      %163 = dma.done [#allocation4], 128
    $region41: #{resnet_block.1} parent=1 // pred_fallthru
      _
    %164 = vsyncpa [#allocation3], 1
    %165 = vsyncpa [#allocation4], 1

</llo_original>
